<compile_context>
chip_gen: v7x
topology: tpu7x:2x2x1
jax: 0.10.0
libtpu: 0.0.40
codegen_flags: <defaults>
</compile_context>

<pallas_src>
import functools

import jax
import jax.numpy as jnp
from jax import lax
from jax.experimental import pallas as pl
from jax.experimental.pallas import tpu as pltpu


# Tap visiting order for the 8 non-center depthwise taps (shared by the
# wrapper-built masks and the kernel loop -- must stay in sync).
_TAP_OFFSETS = tuple((di, dj) for di in (-1, 0, 1) for dj in (-1, 0, 1)
                     if not (di == 0 and dj == 0))


def _conv2d_block_kernel(x_ref, mask_ref, pch_ref, pout_ref, o_ref,
                         *, Cin, Ch, W, HW, batch_block):
    """One grid step: `batch_block` whole images, all channels.

    x_ref    : (batch_block, Cin, HW)  activations, pixels on lanes
    mask_ref : (8, 1, HW) f32          boundary masks, one per non-center tap
    pch_ref  : (Ch, Cin + 11)          [ w0 | b0 | alpha | dw taps 0..8 ]
    pout_ref : (Cout, Ch + 1)          [ w1 | b1_eff ]  (bdw folded into b1)
    o_ref    : (batch_block, Cout, HW) output block (lane-dense store)
    """
    pch = pch_ref[...]
    w0 = pch[:, :Cin]                      # (Ch, Cin)
    b0 = pch[:, Cin:Cin + 1]               # (Ch, 1)
    alpha = pch[:, Cin + 1:Cin + 2]        # (Ch, 1)
    taps = pch[:, Cin + 2:Cin + 11]        # (Ch, 9)

    pout = pout_ref[...]
    w1 = pout[:, :Ch]                      # (Cout, Ch)
    b1 = pout[:, Ch:Ch + 1]                # (Cout, 1)

    # Static unroll over the images in this block (batch_block is small).
    for b in range(batch_block):
        x = x_ref[b]                                                  # (Cin, HW)

        # ---- 1x1 conv #0 on the MXU: (Ch, Cin) @ (Cin, HW) ----
        y = jnp.dot(w0, x, preferred_element_type=jnp.float32) + b0  # (Ch, HW)

        # ---- PReLU (per-channel slope) ----
        y = jnp.where(y > 0, y, alpha * y)

        # ---- depthwise 3x3, padding=1: lane rolls + precomputed float masks ----
        acc = y * taps[:, 4:5]                       # center tap, no zero init
        for t, (di, dj) in enumerate(_TAP_OFFSETS):
            k = (di + 1) * 3 + (dj + 1)
            shift = di * W + dj                      # flat lane offset
            # shifted[:, p] = y[:, (p + shift) % HW]; wrapped / out-of-image
            # lanes are zeroed by the precomputed mask for this tap.
            shifted = pltpu.roll(y, (-shift) % HW, axis=1)
            acc = acc + (shifted * mask_ref[t]) * taps[:, k:k + 1]

        # ---- 1x1 conv #1 on the MXU: (Cout, Ch) @ (Ch, HW) ----
        out = jnp.dot(w1, acc, preferred_element_type=jnp.float32) + b1
        o_ref[b] = out                                                # (Cout, HW)


def _auto_batch_block(B, HW, max_pixels=8192):
    """Largest divisor of B with <= max_pixels lanes/step and >= 2 grid steps."""
    best = 1
    for bb in range(1, B + 1):
        if B % bb:
            continue
        if bb * HW > max_pixels:
            continue
        if B >= 2 and (B // bb) < 2:
            continue                       # keep both v7x TensorCores busy
        best = bb
    return best


def conv2d_block_pallas(x_nchw, params, *, batch_block=None):
    """x_nchw: (B, Cin, H, W) float32. Returns (B, Cout, H, W)."""
    w0, b0, alpha, wdw, bdw, w1, b1 = (
        params["w0"], params["b0"], params["alpha"],
        params["wdw"], params["bdw"], params["w1"], params["b1"])

    B, Cin, H, W = x_nchw.shape
    Ch = w0.shape[0]      # hidden_channels
    Cout = w1.shape[0]
    HW = H * W

    if batch_block is None:
        batch_block = _auto_batch_block(B, HW)
    assert B % batch_block == 0, (B, batch_block)
    G = B // batch_block

    f32 = jnp.float32
    # ---- pack parameters (pure XLA glue, done once) ----
    w0_k = w0[:, :, 0, 0].astype(f32)                       # (Ch, Cin)
    b0_k = b0.reshape(Ch, 1).astype(f32)
    alpha_k = alpha.reshape(Ch, 1).astype(f32)
    taps_k = wdw.reshape(Ch, 9).astype(f32)                 # tap k = (di+1)*3+(dj+1)
    bdw_k = bdw.reshape(Ch, 1).astype(f32)
    w1_k = w1[:, :, 0, 0].astype(f32)                       # (Cout, Ch)
    # Fold depthwise bias into the last bias: w1 @ (acc + bdw) + b1
    #                                      == w1 @ acc + (w1 @ bdw + b1).
    b1_eff = (w1_k @ bdw_k + b1.reshape(Cout, 1).astype(f32))
    pch = jnp.concatenate([w0_k, b0_k, alpha_k, taps_k], axis=1)   # (Ch, Cin+11)
    pout = jnp.concatenate([w1_k, b1_eff], axis=1)                 # (Cout, Ch+1)

    # ---- precomputed float boundary masks, one per non-center tap ----
    p = jnp.arange(HW, dtype=jnp.int32)
    row = p // W
    col = p % W
    masks = []
    for di, dj in _TAP_OFFSETS:
        m = jnp.ones((HW,), bool)
        if di == -1:
            m = jnp.logical_and(m, row >= 1)
        elif di == 1:
            m = jnp.logical_and(m, row < H - 1)
        if dj == -1:
            m = jnp.logical_and(m, col >= 1)
        elif dj == 1:
            m = jnp.logical_and(m, col < W - 1)
        masks.append(m)
    mask = jnp.stack(masks).astype(f32).reshape(8, 1, HW)

    # NCHW -> (B, Cin, HW): a pure reshape, no transpose / extra HBM pass.
    x = x_nchw.astype(f32).reshape(B, Cin, HW)

    kernel = functools.partial(_conv2d_block_kernel, Cin=Cin, Ch=Ch, W=W,
                               HW=HW, batch_block=batch_block)

    def const_spec(shape):
        nd = len(shape)
        return pl.BlockSpec(shape, lambda g, _nd=nd: (0,) * _nd)

    # VMEM budget: double-buffered I/O blocks + in-kernel live intermediates.
    est_bytes = 4 * (2 * batch_block * Cin * HW
                     + 2 * batch_block * Cout * HW
                     + 2 * 8 * HW
                     + 10 * batch_block * Ch * HW)
    vmem_limit = int(min(max(2 * est_bytes, 16 << 20), 48 << 20))

    out = pl.pallas_call(
        kernel,
        out_shape=jax.ShapeDtypeStruct((B, Cout, HW), f32),
        grid_spec=pltpu.PrefetchScalarGridSpec(
            num_scalar_prefetch=0,
            grid=(G,),
            in_specs=[
                pl.BlockSpec((batch_block, Cin, HW), lambda g: (g, 0, 0)),
                const_spec(mask.shape),
                const_spec(pch.shape),
                const_spec(pout.shape),
            ],
            out_specs=pl.BlockSpec((batch_block, Cout, HW),
                                   lambda g: (g, 0, 0)),
        ),
        compiler_params=pltpu.CompilerParams(
            dimension_semantics=("parallel",),
            vmem_limit_bytes=vmem_limit),
    )(x, mask, pch, pout)

    # (B, Cout, HW) -> NCHW, pure reshape.
    return out.reshape(B, Cout, H, W)


def conv2d_block_reference(x_nchw, params):
    """Pure-JAX reference matching torch semantics (NCHW)."""
    w0, b0, alpha, wdw, bdw, w1, b1 = (
        params["w0"], params["b0"], params["alpha"],
        params["wdw"], params["bdw"], params["w1"], params["b1"])
    dn = ("NCHW", "OIHW", "NCHW")
    Ch = w0.shape[0]

    y = lax.conv_general_dilated(x_nchw, w0, (1, 1), "VALID",
                                 dimension_numbers=dn)
    y = y + b0[None, :, None, None]
    y = jnp.where(y > 0, y, alpha[None, :, None, None] * y)
    y = lax.conv_general_dilated(y, wdw, (1, 1), ((1, 1), (1, 1)),
                                 dimension_numbers=dn,
                                 feature_group_count=Ch)
    y = y + bdw[None, :, None, None]
    y = lax.conv_general_dilated(y, w1, (1, 1), "VALID",
                                 dimension_numbers=dn)
    y = y + b1[None, :, None, None]
    return y


if __name__ == "__main__":
    B, Cin, Cout, Ch = 2, 4, 8, 32
    H = W = 16

    key = jax.random.PRNGKey(0)
    ks = jax.random.split(key, 8)

    params = {
        "w0":    jax.random.normal(ks[0], (Ch, Cin, 1, 1), jnp.float32) * 0.2,
        "b0":    jax.random.normal(ks[1], (Ch,), jnp.float32) * 0.1,
        "alpha": jnp.full((Ch,), 0.25, jnp.float32),  # PReLU default init
        "wdw":   jax.random.normal(ks[2], (Ch, 1, 3, 3), jnp.float32) * 0.2,
        "bdw":   jax.random.normal(ks[3], (Ch,), jnp.float32) * 0.1,
        "w1":    jax.random.normal(ks[4], (Cout, Ch, 1, 1), jnp.float32) * 0.2,
        "b1":    jax.random.normal(ks[5], (Cout,), jnp.float32) * 0.1,
    }

    x = jax.random.normal(ks[6], (B, Cin, H, W), jnp.float32)

    out = conv2d_block_pallas(x, params)
    out = jax.block_until_ready(out)

    ref = conv2d_block_reference(x, params)
    ref = jax.block_until_ready(ref)

    assert out.shape == (B, Cout, H, W), out.shape
    assert jnp.allclose(out, ref, atol=1e-4, rtol=1e-4), (
        float(jnp.max(jnp.abs(out - ref))))

    print("KERNEL_OK")
</pallas_src>

<mosaic_0001>
module attributes {stable_mosaic.version = 11 : i64} {
  func.func @_conv2d_block_kernel(%arg0: i32, %arg1: memref<1x4x256xf32, #tpu.memory_space<vmem>>, %arg2: memref<8x1x256xf32, #tpu.memory_space<vmem>>, %arg3: memref<32x15xf32, #tpu.memory_space<vmem>>, %arg4: memref<8x33xf32, #tpu.memory_space<vmem>>, %arg5: memref<1x8x256xf32, #tpu.memory_space<vmem>>) attributes {dimension_semantics = [#tpu.dimension_semantics<parallel>], iteration_bounds = array<i64: 2>, scalar_prefetch = 0 : i64, scratch_operands = 0 : i64, tpu.core_type = #tpu.core_type<tc>, window_params = [{transform_indices = @transform_0, window_bounds = array<i64: 1, 4, 256>}, {pipeline_mode = #tpu.pipeline_mode<synchronous>, transform_indices = @transform_1, window_bounds = array<i64: 8, 1, 256>}, {pipeline_mode = #tpu.pipeline_mode<synchronous>, transform_indices = @transform_2, window_bounds = array<i64: 32, 15>}, {pipeline_mode = #tpu.pipeline_mode<synchronous>, transform_indices = @transform_3, window_bounds = array<i64: 8, 33>}, {transform_indices = @transform_4, window_bounds = array<i64: 1, 8, 256>}]} {
    %c0 = arith.constant 0 : index
    %c0_0 = arith.constant 0 : index
    %0 = vector.load %arg3[%c0, %c0_0] : memref<32x15xf32, #tpu.memory_space<vmem>>, vector<32x15xf32>
    %1 = vector.extract_strided_slice %0 {offsets = [0, 0], sizes = [32, 4], strides = [1, 1]} : vector<32x15xf32> to vector<32x4xf32>
    %2 = vector.extract_strided_slice %0 {offsets = [0, 4], sizes = [32, 1], strides = [1, 1]} : vector<32x15xf32> to vector<32x1xf32>
    %3 = vector.extract_strided_slice %0 {offsets = [0, 5], sizes = [32, 1], strides = [1, 1]} : vector<32x15xf32> to vector<32x1xf32>
    %4 = vector.extract_strided_slice %0 {offsets = [0, 6], sizes = [32, 9], strides = [1, 1]} : vector<32x15xf32> to vector<32x9xf32>
    %c0_1 = arith.constant 0 : index
    %c0_2 = arith.constant 0 : index
    %5 = vector.load %arg4[%c0_1, %c0_2] : memref<8x33xf32, #tpu.memory_space<vmem>>, vector<8x33xf32>
    %6 = vector.extract_strided_slice %5 {offsets = [0, 0], sizes = [8, 32], strides = [1, 1]} : vector<8x33xf32> to vector<8x32xf32>
    %7 = vector.extract_strided_slice %5 {offsets = [0, 32], sizes = [8, 1], strides = [1, 1]} : vector<8x33xf32> to vector<8x1xf32>
    %c0_3 = arith.constant 0 : index
    %c0_4 = arith.constant 0 : index
    %c0_5 = arith.constant 0 : index
    %8 = vector.load %arg1[%c0_3, %c0_4, %c0_5] : memref<1x4x256xf32, #tpu.memory_space<vmem>>, vector<1x4x256xf32>
    %9 = vector.shape_cast %8 : vector<1x4x256xf32> to vector<4x256xf32>
    %cst = arith.constant dense<0.000000e+00> : vector<32x256xf32>
    %10 = tpu.matmul %1, %9, %cst {dimension_numbers = #tpu.dot_dimension_numbers<[1], [0], [0], [1], [0, 0, 1, 1], [], []>} : vector<32x4xf32>, vector<4x256xf32>, vector<32x256xf32> -> vector<32x256xf32>
    %11 = vector.broadcast %2 : vector<32x1xf32> to vector<32x256xf32>
    %12 = arith.addf %10, %11 : vector<32x256xf32>
    %cst_6 = arith.constant 0.000000e+00 : f32
    %13 = vector.broadcast %cst_6 : f32 to vector<32x256xf32>
    %14 = arith.cmpf ogt, %12, %13 : vector<32x256xf32>
    %15 = vector.broadcast %3 : vector<32x1xf32> to vector<32x256xf32>
    %16 = arith.mulf %15, %12 : vector<32x256xf32>
    %17 = arith.select %14, %12, %16 : vector<32x256xi1>, vector<32x256xf32>
    %18 = vector.extract_strided_slice %4 {offsets = [0, 4], sizes = [32, 1], strides = [1, 1]} : vector<32x9xf32> to vector<32x1xf32>
    %19 = vector.broadcast %18 : vector<32x1xf32> to vector<32x256xf32>
    %20 = arith.mulf %17, %19 : vector<32x256xf32>
    %c17_i32 = arith.constant 17 : i32
    %21 = tpu.dynamic_rotate %17 by %c17_i32 dim 1 : vector<32x256xf32>, i32 -> vector<32x256xf32>
    %c0_7 = arith.constant 0 : index
    %c0_8 = arith.constant 0 : index
    %c0_9 = arith.constant 0 : index
    %22 = vector.load %arg2[%c0_7, %c0_8, %c0_9] : memref<8x1x256xf32, #tpu.memory_space<vmem>>, vector<1x1x256xf32>
    %23 = vector.shape_cast %22 : vector<1x1x256xf32> to vector<1x256xf32>
    %24 = vector.broadcast %23 : vector<1x256xf32> to vector<32x256xf32>
    %25 = arith.mulf %21, %24 : vector<32x256xf32>
    %26 = vector.extract_strided_slice %4 {offsets = [0, 0], sizes = [32, 1], strides = [1, 1]} : vector<32x9xf32> to vector<32x1xf32>
    %27 = vector.broadcast %26 : vector<32x1xf32> to vector<32x256xf32>
    %28 = arith.mulf %25, %27 : vector<32x256xf32>
    %29 = arith.addf %20, %28 : vector<32x256xf32>
    %c16_i32 = arith.constant 16 : i32
    %30 = tpu.dynamic_rotate %17 by %c16_i32 dim 1 : vector<32x256xf32>, i32 -> vector<32x256xf32>
    %c1 = arith.constant 1 : index
    %c0_10 = arith.constant 0 : index
    %c0_11 = arith.constant 0 : index
    %31 = vector.load %arg2[%c1, %c0_10, %c0_11] : memref<8x1x256xf32, #tpu.memory_space<vmem>>, vector<1x1x256xf32>
    %32 = vector.shape_cast %31 : vector<1x1x256xf32> to vector<1x256xf32>
    %33 = vector.broadcast %32 : vector<1x256xf32> to vector<32x256xf32>
    %34 = arith.mulf %30, %33 : vector<32x256xf32>
    %35 = vector.extract_strided_slice %4 {offsets = [0, 1], sizes = [32, 1], strides = [1, 1]} : vector<32x9xf32> to vector<32x1xf32>
    %36 = vector.broadcast %35 : vector<32x1xf32> to vector<32x256xf32>
    %37 = arith.mulf %34, %36 : vector<32x256xf32>
    %38 = arith.addf %29, %37 : vector<32x256xf32>
    %c15_i32 = arith.constant 15 : i32
    %39 = tpu.dynamic_rotate %17 by %c15_i32 dim 1 : vector<32x256xf32>, i32 -> vector<32x256xf32>
    %c2 = arith.constant 2 : index
    %c0_12 = arith.constant 0 : index
    %c0_13 = arith.constant 0 : index
    %40 = vector.load %arg2[%c2, %c0_12, %c0_13] : memref<8x1x256xf32, #tpu.memory_space<vmem>>, vector<1x1x256xf32>
    %41 = vector.shape_cast %40 : vector<1x1x256xf32> to vector<1x256xf32>
    %42 = vector.broadcast %41 : vector<1x256xf32> to vector<32x256xf32>
    %43 = arith.mulf %39, %42 : vector<32x256xf32>
    %44 = vector.extract_strided_slice %4 {offsets = [0, 2], sizes = [32, 1], strides = [1, 1]} : vector<32x9xf32> to vector<32x1xf32>
    %45 = vector.broadcast %44 : vector<32x1xf32> to vector<32x256xf32>
    %46 = arith.mulf %43, %45 : vector<32x256xf32>
    %47 = arith.addf %38, %46 : vector<32x256xf32>
    %c1_i32 = arith.constant 1 : i32
    %48 = tpu.dynamic_rotate %17 by %c1_i32 dim 1 : vector<32x256xf32>, i32 -> vector<32x256xf32>
    %c3 = arith.constant 3 : index
    %c0_14 = arith.constant 0 : index
    %c0_15 = arith.constant 0 : index
    %49 = vector.load %arg2[%c3, %c0_14, %c0_15] : memref<8x1x256xf32, #tpu.memory_space<vmem>>, vector<1x1x256xf32>
    %50 = vector.shape_cast %49 : vector<1x1x256xf32> to vector<1x256xf32>
    %51 = vector.broadcast %50 : vector<1x256xf32> to vector<32x256xf32>
    %52 = arith.mulf %48, %51 : vector<32x256xf32>
    %53 = vector.extract_strided_slice %4 {offsets = [0, 3], sizes = [32, 1], strides = [1, 1]} : vector<32x9xf32> to vector<32x1xf32>
    %54 = vector.broadcast %53 : vector<32x1xf32> to vector<32x256xf32>
    %55 = arith.mulf %52, %54 : vector<32x256xf32>
    %56 = arith.addf %47, %55 : vector<32x256xf32>
    %c255_i32 = arith.constant 255 : i32
    %57 = tpu.dynamic_rotate %17 by %c255_i32 dim 1 : vector<32x256xf32>, i32 -> vector<32x256xf32>
    %c4 = arith.constant 4 : index
    %c0_16 = arith.constant 0 : index
    %c0_17 = arith.constant 0 : index
    %58 = vector.load %arg2[%c4, %c0_16, %c0_17] : memref<8x1x256xf32, #tpu.memory_space<vmem>>, vector<1x1x256xf32>
    %59 = vector.shape_cast %58 : vector<1x1x256xf32> to vector<1x256xf32>
    %60 = vector.broadcast %59 : vector<1x256xf32> to vector<32x256xf32>
    %61 = arith.mulf %57, %60 : vector<32x256xf32>
    %62 = vector.extract_strided_slice %4 {offsets = [0, 5], sizes = [32, 1], strides = [1, 1]} : vector<32x9xf32> to vector<32x1xf32>
    %63 = vector.broadcast %62 : vector<32x1xf32> to vector<32x256xf32>
    %64 = arith.mulf %61, %63 : vector<32x256xf32>
    %65 = arith.addf %56, %64 : vector<32x256xf32>
    %c241_i32 = arith.constant 241 : i32
    %66 = tpu.dynamic_rotate %17 by %c241_i32 dim 1 : vector<32x256xf32>, i32 -> vector<32x256xf32>
    %c5 = arith.constant 5 : index
    %c0_18 = arith.constant 0 : index
    %c0_19 = arith.constant 0 : index
    %67 = vector.load %arg2[%c5, %c0_18, %c0_19] : memref<8x1x256xf32, #tpu.memory_space<vmem>>, vector<1x1x256xf32>
    %68 = vector.shape_cast %67 : vector<1x1x256xf32> to vector<1x256xf32>
    %69 = vector.broadcast %68 : vector<1x256xf32> to vector<32x256xf32>
    %70 = arith.mulf %66, %69 : vector<32x256xf32>
    %71 = vector.extract_strided_slice %4 {offsets = [0, 6], sizes = [32, 1], strides = [1, 1]} : vector<32x9xf32> to vector<32x1xf32>
    %72 = vector.broadcast %71 : vector<32x1xf32> to vector<32x256xf32>
    %73 = arith.mulf %70, %72 : vector<32x256xf32>
    %74 = arith.addf %65, %73 : vector<32x256xf32>
    %c240_i32 = arith.constant 240 : i32
    %75 = tpu.dynamic_rotate %17 by %c240_i32 dim 1 : vector<32x256xf32>, i32 -> vector<32x256xf32>
    %c6 = arith.constant 6 : index
    %c0_20 = arith.constant 0 : index
    %c0_21 = arith.constant 0 : index
    %76 = vector.load %arg2[%c6, %c0_20, %c0_21] : memref<8x1x256xf32, #tpu.memory_space<vmem>>, vector<1x1x256xf32>
    %77 = vector.shape_cast %76 : vector<1x1x256xf32> to vector<1x256xf32>
    %78 = vector.broadcast %77 : vector<1x256xf32> to vector<32x256xf32>
    %79 = arith.mulf %75, %78 : vector<32x256xf32>
    %80 = vector.extract_strided_slice %4 {offsets = [0, 7], sizes = [32, 1], strides = [1, 1]} : vector<32x9xf32> to vector<32x1xf32>
    %81 = vector.broadcast %80 : vector<32x1xf32> to vector<32x256xf32>
    %82 = arith.mulf %79, %81 : vector<32x256xf32>
    %83 = arith.addf %74, %82 : vector<32x256xf32>
    %c239_i32 = arith.constant 239 : i32
    %84 = tpu.dynamic_rotate %17 by %c239_i32 dim 1 : vector<32x256xf32>, i32 -> vector<32x256xf32>
    %c7 = arith.constant 7 : index
    %c0_22 = arith.constant 0 : index
    %c0_23 = arith.constant 0 : index
    %85 = vector.load %arg2[%c7, %c0_22, %c0_23] : memref<8x1x256xf32, #tpu.memory_space<vmem>>, vector<1x1x256xf32>
    %86 = vector.shape_cast %85 : vector<1x1x256xf32> to vector<1x256xf32>
    %87 = vector.broadcast %86 : vector<1x256xf32> to vector<32x256xf32>
    %88 = arith.mulf %84, %87 : vector<32x256xf32>
    %89 = vector.extract_strided_slice %4 {offsets = [0, 8], sizes = [32, 1], strides = [1, 1]} : vector<32x9xf32> to vector<32x1xf32>
    %90 = vector.broadcast %89 : vector<32x1xf32> to vector<32x256xf32>
    %91 = arith.mulf %88, %90 : vector<32x256xf32>
    %92 = arith.addf %83, %91 : vector<32x256xf32>
    %cst_24 = arith.constant dense<0.000000e+00> : vector<8x256xf32>
    %93 = tpu.matmul %6, %92, %cst_24 {dimension_numbers = #tpu.dot_dimension_numbers<[1], [0], [0], [1], [0, 0, 1, 1], [], []>} : vector<8x32xf32>, vector<32x256xf32>, vector<8x256xf32> -> vector<8x256xf32>
    %94 = vector.broadcast %7 : vector<8x1xf32> to vector<8x256xf32>
    %95 = arith.addf %93, %94 : vector<8x256xf32>
    %c0_25 = arith.constant 0 : index
    %c0_26 = arith.constant 0 : index
    %c0_27 = arith.constant 0 : index
    %96 = vector.load %arg5[%c0_25, %c0_26, %c0_27] : memref<1x8x256xf32, #tpu.memory_space<vmem>>, vector<1x8x256xf32>
    %97 = vector.shape_cast %96 : vector<1x8x256xf32> to vector<8x256xf32>
    %98 = vector.shape_cast %95 : vector<8x256xf32> to vector<1x8x256xf32>
    tpu.vector_store %arg5[%c0_25, %c0_26, %c0_27], %98 {strides = array<i32>} : memref<1x8x256xf32, #tpu.memory_space<vmem>>, vector<1x8x256xf32>,
    return
  }
  func.func @transform_0(%arg0: i32) -> (i32, i32, i32) {
    %c0_i32 = arith.constant 0 : i32
    %c0_i32_0 = arith.constant 0 : i32
    %c0_i32_1 = arith.constant 0 : i32
    return %arg0, %c0_i32, %c0_i32_0 : i32, i32, i32
  }
  func.func @transform_1(%arg0: i32) -> (i32, i32, i32) {
    %c0_i32 = arith.constant 0 : i32
    %c0_i32_0 = arith.constant 0 : i32
    %c0_i32_1 = arith.constant 0 : i32
    %c0_i32_2 = arith.constant 0 : i32
    return %c0_i32, %c0_i32_0, %c0_i32_1 : i32, i32, i32
  }
  func.func @transform_2(%arg0: i32) -> (i32, i32) {
    %c0_i32 = arith.constant 0 : i32
    %c0_i32_0 = arith.constant 0 : i32
    %c0_i32_1 = arith.constant 0 : i32
    return %c0_i32, %c0_i32_0 : i32, i32
  }
  func.func @transform_3(%arg0: i32) -> (i32, i32) {
    %c0_i32 = arith.constant 0 : i32
    %c0_i32_0 = arith.constant 0 : i32
    %c0_i32_1 = arith.constant 0 : i32
    return %c0_i32, %c0_i32_0 : i32, i32
  }
  func.func @transform_4(%arg0: i32) -> (i32, i32, i32) {
    %c0_i32 = arith.constant 0 : i32
    %c0_i32_0 = arith.constant 0 : i32
    %c0_i32_1 = arith.constant 0 : i32
    return %arg0, %c0_i32, %c0_i32_0 : i32, i32, i32
  }
}

</mosaic_0001>

<llo_original>
// kernel: tpu_custom_call.1
$region0: #{tpu_custom_call.1}
  #allocation0 [shape = 'u32[]', space=smem, size = 0x4, offset = 0x4, fixed_abs, tag = 'smem constant byte address 0x4 - core index']
  #allocation1 [shape = 'u32[144,128]{1,0:T(1,128)}', space=vmem, size = 0x12000, scoped, tag = 'internal scratch']
  %s0 = inlined_call_operand.vmem [shape: f32[2,4,256], index: 0, kind: input, shape index: {}]
  %s1 = inlined_call_operand.vmem [shape: f32[8,1,256], index: 1, kind: input, shape index: {}]
  %s2 = inlined_call_operand.vmem [shape: f32[32,15], index: 2, kind: input, shape index: {}]
  %s3 = inlined_call_operand.vmem [shape: f32[8,33], index: 3, kind: input, shape index: {}]
  %s4 = inlined_call_operand.hbm [shape: f32[2,8,256], index: 4, kind: output, shape index: {}]
  %s5 = sld [smem:[#allocation0]]
  $region49: #{tpu_custom_call.1} parent=0
    _
  %s7 = ssub.s32 1, %s5
  %s8 = scalar_select 0, %s7, %s5
  $region1: #{tpu_custom_call.1} parent=0
    #allocation2 [shape = 'u8[16384]{0}', space=vmem, size = 0x4000, scoped, tag = 'output window, operand 0']
    #allocation3 [shape = 's32[2]{0}', space=sflag, size = 0x8, scoped, tag = 'scoped memory for tpu_custom_call.1']
    %9 = vsyncpa [#allocation3], 0
    %s10 = scalar_lea.sflag [#allocation3], 1
    %11 = vsyncpa %s10, 0
    loop: start=0, step=1, limit=4
    $region2: #{tpu_custom_call.1} parent=1 // loop_pre_header
      _
    $region3: #{tpu_custom_call.1} parent=1 // loop_header
      %s13 = sphi 0, %s17
      %p14 = scmp.ge.s32.totalorder %s13, 4
      %s23 = sphi 0, %s25
      %s26 = sphi 0, %s23
      %s27 = sphi 0, %s26
      %s43 = sphi 0, %s27
      %s47 = sphi 0, %s47
      %s49 = sphi 0, %s47
      %s50 = sphi 0, %s49
      %s64 = sphi 0, %s50
      %s68 = sphi 0, %s68
      %s70 = sphi 0, %s68
      %s71 = sphi 0, %s70
      %s85 = sphi 0, %s71
      %s89 = sphi 0, %s89
      %s91 = sphi 0, %s89
      %s92 = sphi 0, %s91
      %s106 = sphi 0, %s92
      %s112 = sphi 0, %s114
      %s115 = sphi 0, %s112
      %s116 = sphi 0, %s115
      %s132 = sphi 0, %s116
    $region4: #{tpu_custom_call.1} parent=1 // loop_header_branch
      %16 = sbr.rel (%p14) target = $region8
    $region5: #{tpu_custom_call.1} parent=1 // loop_body
      %s18 = ssub.s32 %s13, 1
      %s19 = ssub.s32 %s13, 2
      %s20 = sadd.s32 %s13, 1
      %s21 = ssub.s32 %s13, %s20
      %p22 = scmp.eq.s32.totalorder %s21, 0
      %s24 = sadd.s32 %s23, 1
      %s25 = scalar_select %p22, %s23, %s24
      %p28 = pneg %p22
      %p29 = scmp.eq.s32.totalorder %s13, 1
      %p30 = por %p28, %p29
      %p31 = scmp.ne.s32.totalorder %s23, %s26
      %p32 = scmp.eq.s32.totalorder %s13, 0
      %p33 = por %p31, %p32
      %p34 = scmp.ne.s32.totalorder %s23, %s26
      %p35 = scmp.eq.s32.totalorder %s18, 1
      %p36 = por %p34, %p35
      %p37 = scmp.ne.s32.totalorder %s26, %s27
      %p38 = scmp.eq.s32.totalorder %s18, 0
      %p39 = por %p37, %p38
      %p40 = scmp.ne.s32.totalorder %s26, %s27
      %p41 = scmp.eq.s32.totalorder %s19, 1
      %p42 = por %p40, %p41
      %p44 = scmp.ne.s32.totalorder %s27, %s43
      %p45 = scmp.eq.s32.totalorder %s19, 0
      %p46 = por %p44, %p45
      %s48 = sadd.s32 %s47, 1
      %p51 = scmp.eq.s32.totalorder %s13, 1
      %p52 = scmp.ne.s32.totalorder %s47, %s49
      %p53 = scmp.eq.s32.totalorder %s13, 0
      %p54 = por %p52, %p53
      %p55 = scmp.ne.s32.totalorder %s47, %s49
      %p56 = scmp.eq.s32.totalorder %s18, 1
      %p57 = por %p55, %p56
      %p58 = scmp.ne.s32.totalorder %s49, %s50
      %p59 = scmp.eq.s32.totalorder %s18, 0
      %p60 = por %p58, %p59
      %p61 = scmp.ne.s32.totalorder %s49, %s50
      %p62 = scmp.eq.s32.totalorder %s19, 1
      %p63 = por %p61, %p62
      %p65 = scmp.ne.s32.totalorder %s50, %s64
      %p66 = scmp.eq.s32.totalorder %s19, 0
      %p67 = por %p65, %p66
      %s69 = sadd.s32 %s68, 1
      %p72 = scmp.eq.s32.totalorder %s13, 1
      %p73 = scmp.ne.s32.totalorder %s68, %s70
      %p74 = scmp.eq.s32.totalorder %s13, 0
      %p75 = por %p73, %p74
      %p76 = scmp.ne.s32.totalorder %s68, %s70
      %p77 = scmp.eq.s32.totalorder %s18, 1
      %p78 = por %p76, %p77
      %p79 = scmp.ne.s32.totalorder %s70, %s71
      %p80 = scmp.eq.s32.totalorder %s18, 0
      %p81 = por %p79, %p80
      %p82 = scmp.ne.s32.totalorder %s70, %s71
      %p83 = scmp.eq.s32.totalorder %s19, 1
      %p84 = por %p82, %p83
      %p86 = scmp.ne.s32.totalorder %s71, %s85
      %p87 = scmp.eq.s32.totalorder %s19, 0
      %p88 = por %p86, %p87
      %s90 = sadd.s32 %s89, 1
      %p93 = scmp.eq.s32.totalorder %s13, 1
      %p94 = scmp.ne.s32.totalorder %s89, %s91
      %p95 = scmp.eq.s32.totalorder %s13, 0
      %p96 = por %p94, %p95
      %p97 = scmp.ne.s32.totalorder %s89, %s91
      %p98 = scmp.eq.s32.totalorder %s18, 1
      %p99 = por %p97, %p98
      %p100 = scmp.ne.s32.totalorder %s91, %s92
      %p101 = scmp.eq.s32.totalorder %s18, 0
      %p102 = por %p100, %p101
      %p103 = scmp.ne.s32.totalorder %s91, %s92
      %p104 = scmp.eq.s32.totalorder %s19, 1
      %p105 = por %p103, %p104
      %p107 = scmp.ne.s32.totalorder %s92, %s106
      %p108 = scmp.eq.s32.totalorder %s19, 0
      %p109 = por %p107, %p108
      %s110 = ssub.s32 %s13, %s20
      %p111 = scmp.eq.s32.totalorder %s110, 0
      %s113 = sadd.s32 %s112, 1
      %s114 = scalar_select %p111, %s112, %s113
      %p117 = pneg %p111
      %p118 = scmp.eq.s32.totalorder %s13, 1
      %p119 = por %p117, %p118
      %p120 = scmp.ne.s32.totalorder %s112, %s115
      %p121 = scmp.eq.s32.totalorder %s13, 0
      %p122 = por %p120, %p121
      %p123 = scmp.ne.s32.totalorder %s112, %s115
      %p124 = scmp.eq.s32.totalorder %s18, 1
      %p125 = por %p123, %p124
      %p126 = scmp.ne.s32.totalorder %s115, %s116
      %p127 = scmp.eq.s32.totalorder %s18, 0
      %p128 = por %p126, %p127
      %p129 = scmp.ne.s32.totalorder %s115, %s116
      %p130 = scmp.eq.s32.totalorder %s19, 1
      %p131 = por %p129, %p130
      %p133 = scmp.ne.s32.totalorder %s116, %s132
      %p134 = scmp.eq.s32.totalorder %s19, 0
      %p135 = por %p133, %p134
      %p136 = scmp.le.s32.totalorder 1, %s13
      %p137 = scmp.lt.s32.totalorder %s13, 3
      %p138 = pnand %p136, %p137
      %p139 = pneg %p138
      // Predicated region
      $region9: #{tpu_custom_call.1} parent=5 // pred_check
        _
      $region10: #{tpu_custom_call.1} parent=5 // pred_check_branch
        %141 = sbr.rel (%p138) target = $region12
      $region11: #{tpu_custom_call.1} parent=5 // pred_region
        %s142 = ssub.s32 %s13, 1
        // Predicated region
        $region13: #{tpu_custom_call.1} parent=11 // pred_check
          %p143 = pneg %p60
        $region14: #{tpu_custom_call.1} parent=11 // pred_check_branch
          %145 = sbr.rel (%p143) target = $region16
        $region15: #{tpu_custom_call.1} parent=11 // pred_region
          _
        $region16: #{tpu_custom_call.1} parent=11 // pred_fallthru
          _
        // Predicated region
        $region17: #{tpu_custom_call.1} parent=11 // pred_check
          %p146 = pneg %p81
        $region18: #{tpu_custom_call.1} parent=11 // pred_check_branch
          %148 = sbr.rel (%p146) target = $region20
        $region19: #{tpu_custom_call.1} parent=11 // pred_region
          _
        $region20: #{tpu_custom_call.1} parent=11 // pred_fallthru
          _
        // Predicated region
        $region21: #{tpu_custom_call.1} parent=11 // pred_check
          %p149 = pneg %p102
        $region22: #{tpu_custom_call.1} parent=11 // pred_check_branch
          %151 = sbr.rel (%p149) target = $region24
        $region23: #{tpu_custom_call.1} parent=11 // pred_region
          _
        $region24: #{tpu_custom_call.1} parent=11 // pred_fallthru
          _
      $region12: #{tpu_custom_call.1} parent=5 // pred_fallthru
        _
      %p152 = scmp.lt.s32.totalorder %s13, 2
      // Predicated region
      $region25: #{tpu_custom_call.1} parent=5 // pred_check
        %p153 = pneg %p152
      $region26: #{tpu_custom_call.1} parent=5 // pred_check_branch
        %155 = sbr.rel (%p153) target = $region28
      $region27: #{tpu_custom_call.1} parent=5 // pred_region
        // Predicated region
        $region29: #{tpu_custom_call.1} parent=27 // pred_check
          %p156 = pneg %p33
        $region30: #{tpu_custom_call.1} parent=27 // pred_check_branch
          %158 = sbr.rel (%p156) target = $region32
        $region31: #{tpu_custom_call.1} parent=27 // pred_region
          %p159 = scmp.lt.s32.totalorder %s13, 1
          %s160 = scalar_select %p159, %s13, 1
          %s161 = smul.addr %s160, 2
          %s162 = smul.addr %s161, 4
          %s163 = scalar_lea.vmem %s0, %s162
        $region32: #{tpu_custom_call.1} parent=27 // pred_fallthru
          _
      $region28: #{tpu_custom_call.1} parent=5 // pred_fallthru
        _
      %p164 = scmp.le.s32.totalorder 1, %s13
      %p165 = scmp.lt.s32.totalorder %s13, 3
      %p166 = pnand %p164, %p165
      %p167 = pneg %p166
      // Predicated region
      $region33: #{tpu_custom_call.1} parent=5 // pred_check
        _
      $region34: #{tpu_custom_call.1} parent=5 // pred_check_branch
        %169 = sbr.rel (%p166) target = $region36
      $region35: #{tpu_custom_call.1} parent=5 // pred_region
        %s170 = ssub.s32 %s13, 1
        %p171 = scmp.lt.s32.totalorder %s18, 1
        %s172 = scalar_select %p171, %s18, 1
        %s173 = smul.addr %s172, 2
        %s174 = smul.addr %s173, 4
        %s175 = scalar_lea.vmem %s0, %s174
        %p176 = pneg %p39
        %p177 = pneg %p36
        %p178 = pneg %p60
        %p179 = pneg %p57
        %p180 = pneg %p81
        %p181 = pneg %p78
        %p182 = pneg %p102
        %p183 = pneg %p99
        %p184 = pneg %p128
        %p185 = pneg %p125
        %s186 = sand.u32 %s115, 1
        %s187 = scalar_lea.sflag [#allocation3], %s186
        %s188 = sand.u32 %s115, 1
        %s189 = smul.addr %s188, 16
        %s190 = scalar_lea.vmem [#allocation2], %s189
        %p191 = scmp.lt.s32.totalorder %s18, 1
        %s192 = scalar_select %p191, %s18, 1
        %s193 = smul.addr %s192, 2
        %s194 = smul.addr %s193, 4
        %s195 = scalar_lea.vmem %s0, %s194
        %v196 = vld [vmem:[%s2] sm:$0xff]
        %v197 = vld [vmem:[%s2 + $0x8] sm:$0xff]
        %v198 = vld [vmem:[%s2 + $0x10] sm:$0xff]
        %v199 = vld [vmem:[%s2 + $0x18] sm:$0xff]
        %v200 = vld [vmem:[%s3] sm:$0xff]
        %v201 = vld [vmem:[%s195] sm:$0xff]
        %203 = vset.pattern.permute.xlu0 4
        %204 = vperm.xlu0 %203, %v196
        %v205 = vpop.permute.xlu0 %204
        %208 = vset.pattern.permute.xlu0 4
        %209 = vperm.xlu0 %208, %v197
        %v210 = vpop.permute.xlu0 %209
        %213 = vset.pattern.permute.xlu0 4
        %214 = vperm.xlu0 %213, %v198
        %v215 = vpop.permute.xlu0 %214
        %218 = vset.pattern.permute.xlu0 4
        %219 = vperm.xlu0 %218, %v199
        %v220 = vpop.permute.xlu0 %219
        %v223 = vcombine.high %v201, %v201
        %vm224 = vcmask 31744
        %v225 = vsel %vm224, %v196, 0
        %v227 = vsel %vm224, %v197, 0
        %v229 = vsel %vm224, %v198, 0
        %v231 = vsel %vm224, %v199, 0
        %vm233 = vcmask 1043456
        %v234 = vsel %vm233, %v201, 0
        %v236 = vsel %vm233, %v223, 0
        %238 = vmatprep.subr.mxu0 %v236
        %239 = vmatpush1.msra.mxu0 %v234
        %240 = vmatprep.subr.mxu0 0.0
        %241 = vmatpush1.msra.mxu0 0.0
        %242 = vmatprep.subr.mxu0 0.0
        %243 = vmatpush1.msra.mxu0 0.0
        %244 = vmatprep.subr.mxu0 0.0
        %245 = vmatpush1.msra.mxu0 0.0
        %246 = vmatprep.subr.mxu0 0.0
        %247 = vmatpush1.msra.mxu0 0.0
        %248 = vmatprep.subr.mxu0 0.0
        %249 = vmatpush1.msra.mxu0 0.0
        %250 = vmatprep.subr.mxu0 0.0
        %251 = vmatpush1.msra.mxu0 0.0
        %252 = vmatprep.subr.mxu0 0.0
        %253 = vmatpush1.msra.mxu0 0.0
        %254 = vmatprep.subr.mxu0 0.0
        %255 = vmatpush1.msra.mxu0 0.0
        %256 = vmatprep.subr.mxu0 0.0
        %257 = vmatpush1.msra.mxu0 0.0
        %258 = vmatprep.subr.mxu0 0.0
        %259 = vmatpush1.msra.mxu0 0.0
        %260 = vmatprep.subr.mxu0 0.0
        %261 = vmatpush1.msra.mxu0 0.0
        %262 = vmatprep.subr.mxu0 0.0
        %263 = vmatpush1.msra.mxu0 0.0
        %264 = vmatprep.subr.mxu0 0.0
        %265 = vmatpush1.msra.mxu0 0.0
        %266 = vmatprep.subr.mxu0 0.0
        %267 = vmatpush1.msra.mxu0 0.0
        %268 = vmatprep.subr.mxu0 0.0
        %269 = vmatpush1.msra.mxu0 0.0
        %270 = vmatprep.subr.mxu0 0.0
        %271 = vmatpush1.msra.mxu0 0.0
        %272 = vmatprep.subr.mxu0 0.0
        %273 = vmatpush1.msra.mxu0 0.0
        %274 = vmatprep.subr.mxu0 0.0
        %275 = vmatpush1.msra.mxu0 0.0
        %276 = vmatprep.subr.mxu0 0.0
        %277 = vmatpush1.msra.mxu0 0.0
        %278 = vmatprep.subr.mxu0 0.0
        %279 = vmatpush1.msra.mxu0 0.0
        %280 = vmatprep.subr.mxu0 0.0
        %281 = vmatpush1.msra.mxu0 0.0
        %282 = vmatprep.subr.mxu0 0.0
        %283 = vmatpush1.msra.mxu0 0.0
        %284 = vmatprep.subr.mxu0 0.0
        %285 = vmatpush1.msra.mxu0 0.0
        %286 = vmatprep.subr.mxu0 0.0
        %287 = vmatpush1.msra.mxu0 0.0
        %288 = vmatprep.subr.mxu0 0.0
        %289 = vmatpush1.msra.mxu0 0.0
        %290 = vmatprep.subr.mxu0 0.0
        %291 = vmatpush1.msra.mxu0 0.0
        %292 = vmatprep.subr.mxu0 0.0
        %293 = vmatpush1.msra.mxu0 0.0
        %294 = vmatprep.subr.mxu0 0.0
        %295 = vmatpush1.msra.mxu0 0.0
        %296 = vmatprep.subr.mxu0 0.0
        %297 = vmatpush1.msra.mxu0 0.0
        %298 = vmatprep.subr.mxu0 0.0
        %299 = vmatpush1.msra.mxu0 0.0
        %300 = vmatprep.subr.mxu0 0.0
        %301 = vmatpush1.msra.mxu0 0.0
        %302 = vmatprep.mubr.f32.mxu0 0.0
        %303 = vmatmul.mubr.f32.gmra.mrb[0].mxu0 %v225
        %v304 = vpop.f32.mrb[0].mxu0
        %v305 = vadd.f32 %v205, %v304
        %v306 = vpop.f32.mrb[0].mxu0
        %v307 = vadd.f32 %v205, %v306
        %308 = vmatprep.mubr.f32.mxu0 0.0
        %309 = vmatmul.mubr.f32.gmra.mrb[0].mxu0 %v227
        %v310 = vpop.f32.mrb[0].mxu0
        %v311 = vadd.f32 %v210, %v310
        %v312 = vpop.f32.mrb[0].mxu0
        %v313 = vadd.f32 %v210, %v312
        %314 = vmatprep.mubr.f32.mxu0 0.0
        %315 = vmatmul.mubr.f32.gmra.mrb[0].mxu0 %v229
        %v316 = vpop.f32.mrb[0].mxu0
        %v317 = vadd.f32 %v215, %v316
        %v318 = vpop.f32.mrb[0].mxu0
        %v319 = vadd.f32 %v215, %v318
        %320 = vmatprep.mubr.f32.mxu0 0.0
        %321 = vmatmul.mubr.f32.gmra.mrb[0].mxu0 %v231
        %v322 = vpop.f32.mrb[0].mxu0
        %v323 = vadd.f32 %v220, %v322
        %v324 = vpop.f32.mrb[0].mxu0
        %v325 = vadd.f32 %v220, %v324
        %326 = vdwg.mxu0
        %vm327 = vcmp.gt.f32.partialorder %v305, 0.0
        %vm328 = vcmp.gt.f32.partialorder %v307, 0.0
        %vm329 = vcmp.gt.f32.partialorder %v311, 0.0
        %vm330 = vcmp.gt.f32.partialorder %v313, 0.0
        %vm331 = vcmp.gt.f32.partialorder %v317, 0.0
        %vm332 = vcmp.gt.f32.partialorder %v319, 0.0
        %vm333 = vcmp.gt.f32.partialorder %v323, 0.0
        %vm334 = vcmp.gt.f32.partialorder %v325, 0.0
        %335 = vset.pattern.permute.xlu0 5
        %336 = vperm.xlu0 %335, %v196
        %v337 = vpop.permute.xlu0 %336
        %339 = vset.pattern.permute.xlu0 5
        %340 = vperm.xlu0 %339, %v197
        %v341 = vpop.permute.xlu0 %340
        %343 = vset.pattern.permute.xlu0 5
        %344 = vperm.xlu0 %343, %v198
        %v345 = vpop.permute.xlu0 %344
        %347 = vset.pattern.permute.xlu0 5
        %348 = vperm.xlu0 %347, %v199
        %v349 = vpop.permute.xlu0 %348
        %v351 = vmul.f32 %v337, %v305
        %v352 = vmul.f32 %v337, %v307
        %v353 = vmul.f32 %v341, %v311
        %v354 = vmul.f32 %v341, %v313
        %v355 = vmul.f32 %v345, %v317
        %v356 = vmul.f32 %v345, %v319
        %v357 = vmul.f32 %v349, %v323
        %v358 = vmul.f32 %v349, %v325
        %v359 = vsel %vm327, %v305, %v351
        %v360 = vsel %vm328, %v307, %v352
        %v361 = vsel %vm329, %v311, %v353
        %v362 = vsel %vm330, %v313, %v354
        %v363 = vsel %vm331, %v317, %v355
        %v364 = vsel %vm332, %v319, %v356
        %v365 = vsel %vm333, %v323, %v357
        %v366 = vsel %vm334, %v325, %v358
        %367 = vset.pattern.permute.xlu0 10
        %368 = vperm.xlu0 %367, %v196
        %v369 = vpop.permute.xlu0 %368
        %371 = vset.pattern.permute.xlu0 10
        %372 = vperm.xlu0 %371, %v197
        %v373 = vpop.permute.xlu0 %372
        %375 = vset.pattern.permute.xlu0 10
        %376 = vperm.xlu0 %375, %v198
        %v377 = vpop.permute.xlu0 %376
        %379 = vset.pattern.permute.xlu0 10
        %380 = vperm.xlu0 %379, %v199
        %v381 = vpop.permute.xlu0 %380
        %v383 = vmul.f32 %v359, %v369
        %v384 = vmul.f32 %v360, %v369
        %v385 = vmul.f32 %v361, %v373
        %v386 = vmul.f32 %v362, %v373
        %v387 = vmul.f32 %v363, %v377
        %v388 = vmul.f32 %v364, %v377
        %v389 = vmul.f32 %v365, %v381
        %v390 = vmul.f32 %v366, %v381
        %391 = vrot.lane.b32.xlu0 %v359, 17
        %v392 = vpop.permute.xlu0 %391
        %393 = vrot.lane.b32.xlu0 %v361, 17
        %v394 = vpop.permute.xlu0 %393
        %395 = vrot.lane.b32.xlu0 %v363, 17
        %v396 = vpop.permute.xlu0 %395
        %397 = vrot.lane.b32.xlu0 %v365, 17
        %v398 = vpop.permute.xlu0 %397
        %399 = vrot.lane.b32.xlu0 %v360, 17
        %v400 = vpop.permute.xlu0 %399
        %401 = vrot.lane.b32.xlu0 %v362, 17
        %v402 = vpop.permute.xlu0 %401
        %403 = vrot.lane.b32.xlu0 %v364, 17
        %v404 = vpop.permute.xlu0 %403
        %405 = vrot.lane.b32.xlu0 %v366, 17
        %v406 = vpop.permute.xlu0 %405
        %v407 = vlaneseq
        %v408 = vand.u32 %v407, 127
        %vm409 = vcmp.lt.s32.totalorder %v408, 17
        %v410 = vsel %vm409, %v392, %v400
        %v411 = vsel %vm409, %v394, %v402
        %v412 = vsel %vm409, %v396, %v404
        %v413 = vsel %vm409, %v398, %v406
        %v414 = vsel %vm409, %v400, %v392
        %v415 = vsel %vm409, %v402, %v394
        %v416 = vsel %vm409, %v404, %v396
        %v417 = vsel %vm409, %v406, %v398
        %v418 = vld [vmem:[%s1] sm:$0x3]
        %v420 = vlaneseq
        %v421 = vshrl.u32 %v420, 7
        %v422 = vsub.s32 0, %v421
        %v423 = vrot.slane %v418, %v422
        %v424 = vlaneseq
        %v425 = vshrl.u32 %v424, 7
        %v426 = vsub.s32 1, %v425
        %v427 = vrot.slane %v418, %v426
        %v430 = vmul.f32 %v414, %v423
        %v431 = vmul.f32 %v410, %v427
        %v432 = vmul.f32 %v415, %v423
        %v433 = vmul.f32 %v411, %v427
        %v434 = vmul.f32 %v416, %v423
        %v435 = vmul.f32 %v412, %v427
        %v436 = vmul.f32 %v417, %v423
        %v437 = vmul.f32 %v413, %v427
        %438 = vset.pattern.permute.xlu0 6
        %439 = vperm.xlu0 %438, %v196
        %v440 = vpop.permute.xlu0 %439
        %442 = vset.pattern.permute.xlu0 6
        %443 = vperm.xlu0 %442, %v197
        %v444 = vpop.permute.xlu0 %443
        %446 = vset.pattern.permute.xlu0 6
        %447 = vperm.xlu0 %446, %v198
        %v448 = vpop.permute.xlu0 %447
        %450 = vset.pattern.permute.xlu0 6
        %451 = vperm.xlu0 %450, %v199
        %v452 = vpop.permute.xlu0 %451
        %v454 = vmul.f32 %v430, %v440
        %v455 = vmul.f32 %v431, %v440
        %v456 = vmul.f32 %v432, %v444
        %v457 = vmul.f32 %v433, %v444
        %v458 = vmul.f32 %v434, %v448
        %v459 = vmul.f32 %v435, %v448
        %v460 = vmul.f32 %v436, %v452
        %v461 = vmul.f32 %v437, %v452
        %v462 = vadd.f32 %v383, %v454
        %v463 = vadd.f32 %v384, %v455
        %v464 = vadd.f32 %v385, %v456
        %v465 = vadd.f32 %v386, %v457
        %v466 = vadd.f32 %v387, %v458
        %v467 = vadd.f32 %v388, %v459
        %v468 = vadd.f32 %v389, %v460
        %v469 = vadd.f32 %v390, %v461
        %470 = vrot.lane.b32.xlu0 %v359, 16
        %v471 = vpop.permute.xlu0 %470
        %472 = vrot.lane.b32.xlu0 %v361, 16
        %v473 = vpop.permute.xlu0 %472
        %474 = vrot.lane.b32.xlu0 %v363, 16
        %v475 = vpop.permute.xlu0 %474
        %476 = vrot.lane.b32.xlu0 %v365, 16
        %v477 = vpop.permute.xlu0 %476
        %478 = vrot.lane.b32.xlu0 %v360, 16
        %v479 = vpop.permute.xlu0 %478
        %480 = vrot.lane.b32.xlu0 %v362, 16
        %v481 = vpop.permute.xlu0 %480
        %482 = vrot.lane.b32.xlu0 %v364, 16
        %v483 = vpop.permute.xlu0 %482
        %484 = vrot.lane.b32.xlu0 %v366, 16
        %v485 = vpop.permute.xlu0 %484
        %vm486 = vcmp.lt.s32.totalorder %v408, 16
        %v487 = vsel %vm486, %v471, %v479
        %v488 = vsel %vm486, %v473, %v481
        %v489 = vsel %vm486, %v475, %v483
        %v490 = vsel %vm486, %v477, %v485
        %v491 = vsel %vm486, %v479, %v471
        %v492 = vsel %vm486, %v481, %v473
        %v493 = vsel %vm486, %v483, %v475
        %v494 = vsel %vm486, %v485, %v477
        %s495 = scalar_lea.vmem %s1, 2
        %v496 = vld [vmem:[%s495] sm:$0x3]
        %v498 = vlaneseq
        %v499 = vshrl.u32 %v498, 7
        %v500 = vsub.s32 0, %v499
        %v501 = vrot.slane %v496, %v500
        %v502 = vlaneseq
        %v503 = vshrl.u32 %v502, 7
        %v504 = vsub.s32 1, %v503
        %v505 = vrot.slane %v496, %v504
        %v508 = vmul.f32 %v491, %v501
        %v509 = vmul.f32 %v487, %v505
        %v510 = vmul.f32 %v492, %v501
        %v511 = vmul.f32 %v488, %v505
        %v512 = vmul.f32 %v493, %v501
        %v513 = vmul.f32 %v489, %v505
        %v514 = vmul.f32 %v494, %v501
        %v515 = vmul.f32 %v490, %v505
        %516 = vset.pattern.permute.xlu0 7
        %517 = vperm.xlu0 %516, %v196
        %v518 = vpop.permute.xlu0 %517
        %520 = vset.pattern.permute.xlu0 7
        %521 = vperm.xlu0 %520, %v197
        %v522 = vpop.permute.xlu0 %521
        %524 = vset.pattern.permute.xlu0 7
        %525 = vperm.xlu0 %524, %v198
        %v526 = vpop.permute.xlu0 %525
        %528 = vset.pattern.permute.xlu0 7
        %529 = vperm.xlu0 %528, %v199
        %v530 = vpop.permute.xlu0 %529
        %v532 = vmul.f32 %v508, %v518
        %v533 = vmul.f32 %v509, %v518
        %v534 = vmul.f32 %v510, %v522
        %v535 = vmul.f32 %v511, %v522
        %v536 = vmul.f32 %v512, %v526
        %v537 = vmul.f32 %v513, %v526
        %v538 = vmul.f32 %v514, %v530
        %v539 = vmul.f32 %v515, %v530
        %v540 = vadd.f32 %v462, %v532
        %v541 = vadd.f32 %v463, %v533
        %v542 = vadd.f32 %v464, %v534
        %v543 = vadd.f32 %v465, %v535
        %v544 = vadd.f32 %v466, %v536
        %v545 = vadd.f32 %v467, %v537
        %v546 = vadd.f32 %v468, %v538
        %v547 = vadd.f32 %v469, %v539
        %548 = vrot.lane.b32.xlu0 %v359, 15
        %v549 = vpop.permute.xlu0 %548
        %550 = vrot.lane.b32.xlu0 %v361, 15
        %v551 = vpop.permute.xlu0 %550
        %552 = vrot.lane.b32.xlu0 %v363, 15
        %v553 = vpop.permute.xlu0 %552
        %554 = vrot.lane.b32.xlu0 %v365, 15
        %v555 = vpop.permute.xlu0 %554
        %556 = vrot.lane.b32.xlu0 %v360, 15
        %v557 = vpop.permute.xlu0 %556
        %558 = vrot.lane.b32.xlu0 %v362, 15
        %v559 = vpop.permute.xlu0 %558
        %560 = vrot.lane.b32.xlu0 %v364, 15
        %v561 = vpop.permute.xlu0 %560
        %562 = vrot.lane.b32.xlu0 %v366, 15
        %v563 = vpop.permute.xlu0 %562
        %vm564 = vcmp.lt.s32.totalorder %v408, 15
        %v565 = vsel %vm564, %v549, %v557
        %v566 = vsel %vm564, %v551, %v559
        %v567 = vsel %vm564, %v553, %v561
        %v568 = vsel %vm564, %v555, %v563
        %v569 = vsel %vm564, %v557, %v549
        %v570 = vsel %vm564, %v559, %v551
        %v571 = vsel %vm564, %v561, %v553
        %v572 = vsel %vm564, %v563, %v555
        %s573 = scalar_lea.vmem %s1, 4
        %v574 = vld [vmem:[%s573] sm:$0x3]
        %v576 = vlaneseq
        %v577 = vshrl.u32 %v576, 7
        %v578 = vsub.s32 0, %v577
        %v579 = vrot.slane %v574, %v578
        %v580 = vlaneseq
        %v581 = vshrl.u32 %v580, 7
        %v582 = vsub.s32 1, %v581
        %v583 = vrot.slane %v574, %v582
        %v586 = vmul.f32 %v569, %v579
        %v587 = vmul.f32 %v565, %v583
        %v588 = vmul.f32 %v570, %v579
        %v589 = vmul.f32 %v566, %v583
        %v590 = vmul.f32 %v571, %v579
        %v591 = vmul.f32 %v567, %v583
        %v592 = vmul.f32 %v572, %v579
        %v593 = vmul.f32 %v568, %v583
        %594 = vset.pattern.permute.xlu0 8
        %595 = vperm.xlu0 %594, %v196
        %v596 = vpop.permute.xlu0 %595
        %598 = vset.pattern.permute.xlu0 8
        %599 = vperm.xlu0 %598, %v197
        %v600 = vpop.permute.xlu0 %599
        %602 = vset.pattern.permute.xlu0 8
        %603 = vperm.xlu0 %602, %v198
        %v604 = vpop.permute.xlu0 %603
        %606 = vset.pattern.permute.xlu0 8
        %607 = vperm.xlu0 %606, %v199
        %v608 = vpop.permute.xlu0 %607
        %v610 = vmul.f32 %v586, %v596
        %v611 = vmul.f32 %v587, %v596
        %v612 = vmul.f32 %v588, %v600
        %v613 = vmul.f32 %v589, %v600
        %v614 = vmul.f32 %v590, %v604
        %v615 = vmul.f32 %v591, %v604
        %v616 = vmul.f32 %v592, %v608
        %v617 = vmul.f32 %v593, %v608
        %v618 = vadd.f32 %v540, %v610
        %v619 = vadd.f32 %v541, %v611
        %v620 = vadd.f32 %v542, %v612
        %v621 = vadd.f32 %v543, %v613
        %v622 = vadd.f32 %v544, %v614
        %v623 = vadd.f32 %v545, %v615
        %v624 = vadd.f32 %v546, %v616
        %v625 = vadd.f32 %v547, %v617
        %626 = vrot.lane.b32.xlu0 %v359, 1
        %v627 = vpop.permute.xlu0 %626
        %628 = vrot.lane.b32.xlu0 %v361, 1
        %v629 = vpop.permute.xlu0 %628
        %630 = vrot.lane.b32.xlu0 %v363, 1
        %v631 = vpop.permute.xlu0 %630
        %632 = vrot.lane.b32.xlu0 %v365, 1
        %v633 = vpop.permute.xlu0 %632
        %634 = vrot.lane.b32.xlu0 %v360, 1
        %v635 = vpop.permute.xlu0 %634
        %636 = vrot.lane.b32.xlu0 %v362, 1
        %v637 = vpop.permute.xlu0 %636
        %638 = vrot.lane.b32.xlu0 %v364, 1
        %v639 = vpop.permute.xlu0 %638
        %640 = vrot.lane.b32.xlu0 %v366, 1
        %v641 = vpop.permute.xlu0 %640
        %vm642 = vcmp.lt.s32.totalorder %v408, 1
        %v643 = vsel %vm642, %v627, %v635
        %v644 = vsel %vm642, %v629, %v637
        %v645 = vsel %vm642, %v631, %v639
        %v646 = vsel %vm642, %v633, %v641
        %v647 = vsel %vm642, %v635, %v627
        %v648 = vsel %vm642, %v637, %v629
        %v649 = vsel %vm642, %v639, %v631
        %v650 = vsel %vm642, %v641, %v633
        %s651 = scalar_lea.vmem %s1, 6
        %v652 = vld [vmem:[%s651] sm:$0x3]
        %v654 = vlaneseq
        %v655 = vshrl.u32 %v654, 7
        %v656 = vsub.s32 0, %v655
        %v657 = vrot.slane %v652, %v656
        %v658 = vlaneseq
        %v659 = vshrl.u32 %v658, 7
        %v660 = vsub.s32 1, %v659
        %v661 = vrot.slane %v652, %v660
        %v664 = vmul.f32 %v647, %v657
        %v665 = vmul.f32 %v643, %v661
        %v666 = vmul.f32 %v648, %v657
        %v667 = vmul.f32 %v644, %v661
        %v668 = vmul.f32 %v649, %v657
        %v669 = vmul.f32 %v645, %v661
        %v670 = vmul.f32 %v650, %v657
        %v671 = vmul.f32 %v646, %v661
        %672 = vset.pattern.permute.xlu0 9
        %673 = vperm.xlu0 %672, %v196
        %v674 = vpop.permute.xlu0 %673
        %676 = vset.pattern.permute.xlu0 9
        %677 = vperm.xlu0 %676, %v197
        %v678 = vpop.permute.xlu0 %677
        %680 = vset.pattern.permute.xlu0 9
        %681 = vperm.xlu0 %680, %v198
        %v682 = vpop.permute.xlu0 %681
        %684 = vset.pattern.permute.xlu0 9
        %685 = vperm.xlu0 %684, %v199
        %v686 = vpop.permute.xlu0 %685
        %v688 = vmul.f32 %v664, %v674
        %v689 = vmul.f32 %v665, %v674
        %v690 = vmul.f32 %v666, %v678
        %v691 = vmul.f32 %v667, %v678
        %v692 = vmul.f32 %v668, %v682
        %v693 = vmul.f32 %v669, %v682
        %v694 = vmul.f32 %v670, %v686
        %v695 = vmul.f32 %v671, %v686
        %v696 = vadd.f32 %v618, %v688
        %v697 = vadd.f32 %v619, %v689
        %v698 = vadd.f32 %v620, %v690
        %v699 = vadd.f32 %v621, %v691
        %v700 = vadd.f32 %v622, %v692
        %v701 = vadd.f32 %v623, %v693
        %v702 = vadd.f32 %v624, %v694
        %v703 = vadd.f32 %v625, %v695
        %704 = vrot.lane.b32.xlu0 %v359, 127
        %v705 = vpop.permute.xlu0 %704
        %706 = vrot.lane.b32.xlu0 %v361, 127
        %v707 = vpop.permute.xlu0 %706
        %708 = vrot.lane.b32.xlu0 %v363, 127
        %v709 = vpop.permute.xlu0 %708
        %710 = vrot.lane.b32.xlu0 %v365, 127
        %v711 = vpop.permute.xlu0 %710
        %712 = vrot.lane.b32.xlu0 %v360, 127
        %v713 = vpop.permute.xlu0 %712
        %714 = vrot.lane.b32.xlu0 %v362, 127
        %v715 = vpop.permute.xlu0 %714
        %716 = vrot.lane.b32.xlu0 %v364, 127
        %v717 = vpop.permute.xlu0 %716
        %718 = vrot.lane.b32.xlu0 %v366, 127
        %v719 = vpop.permute.xlu0 %718
        %vm720 = vcmp.lt.s32.totalorder %v408, 127
        %v721 = vsel %vm720, %v705, %v713
        %v722 = vsel %vm720, %v707, %v715
        %v723 = vsel %vm720, %v709, %v717
        %v724 = vsel %vm720, %v711, %v719
        %v725 = vsel %vm720, %v713, %v705
        %v726 = vsel %vm720, %v715, %v707
        %v727 = vsel %vm720, %v717, %v709
        %v728 = vsel %vm720, %v719, %v711
        %s729 = scalar_lea.vmem %s1, 8
        %v730 = vld [vmem:[%s729] sm:$0x3]
        %v732 = vlaneseq
        %v733 = vshrl.u32 %v732, 7
        %v734 = vsub.s32 0, %v733
        %v735 = vrot.slane %v730, %v734
        %v736 = vlaneseq
        %v737 = vshrl.u32 %v736, 7
        %v738 = vsub.s32 1, %v737
        %v739 = vrot.slane %v730, %v738
        %v742 = vmul.f32 %v721, %v735
        %v743 = vmul.f32 %v725, %v739
        %v744 = vmul.f32 %v722, %v735
        %v745 = vmul.f32 %v726, %v739
        %v746 = vmul.f32 %v723, %v735
        %v747 = vmul.f32 %v727, %v739
        %v748 = vmul.f32 %v724, %v735
        %v749 = vmul.f32 %v728, %v739
        %750 = vset.pattern.permute.xlu0 11
        %751 = vperm.xlu0 %750, %v196
        %v752 = vpop.permute.xlu0 %751
        %754 = vset.pattern.permute.xlu0 11
        %755 = vperm.xlu0 %754, %v197
        %v756 = vpop.permute.xlu0 %755
        %758 = vset.pattern.permute.xlu0 11
        %759 = vperm.xlu0 %758, %v198
        %v760 = vpop.permute.xlu0 %759
        %762 = vset.pattern.permute.xlu0 11
        %763 = vperm.xlu0 %762, %v199
        %v764 = vpop.permute.xlu0 %763
        %v766 = vmul.f32 %v742, %v752
        %v767 = vmul.f32 %v743, %v752
        %v768 = vmul.f32 %v744, %v756
        %v769 = vmul.f32 %v745, %v756
        %v770 = vmul.f32 %v746, %v760
        %v771 = vmul.f32 %v747, %v760
        %v772 = vmul.f32 %v748, %v764
        %v773 = vmul.f32 %v749, %v764
        %v774 = vadd.f32 %v696, %v766
        %v775 = vadd.f32 %v697, %v767
        %v776 = vadd.f32 %v698, %v768
        %v777 = vadd.f32 %v699, %v769
        %v778 = vadd.f32 %v700, %v770
        %v779 = vadd.f32 %v701, %v771
        %v780 = vadd.f32 %v702, %v772
        %v781 = vadd.f32 %v703, %v773
        %782 = vrot.lane.b32.xlu0 %v359, 113
        %v783 = vpop.permute.xlu0 %782
        %784 = vrot.lane.b32.xlu0 %v361, 113
        %v785 = vpop.permute.xlu0 %784
        %786 = vrot.lane.b32.xlu0 %v363, 113
        %v787 = vpop.permute.xlu0 %786
        %788 = vrot.lane.b32.xlu0 %v365, 113
        %v789 = vpop.permute.xlu0 %788
        %790 = vrot.lane.b32.xlu0 %v360, 113
        %v791 = vpop.permute.xlu0 %790
        %792 = vrot.lane.b32.xlu0 %v362, 113
        %v793 = vpop.permute.xlu0 %792
        %794 = vrot.lane.b32.xlu0 %v364, 113
        %v795 = vpop.permute.xlu0 %794
        %796 = vrot.lane.b32.xlu0 %v366, 113
        %v797 = vpop.permute.xlu0 %796
        %vm798 = vcmp.lt.s32.totalorder %v408, 113
        %v799 = vsel %vm798, %v783, %v791
        %v800 = vsel %vm798, %v785, %v793
        %v801 = vsel %vm798, %v787, %v795
        %v802 = vsel %vm798, %v789, %v797
        %v803 = vsel %vm798, %v791, %v783
        %v804 = vsel %vm798, %v793, %v785
        %v805 = vsel %vm798, %v795, %v787
        %v806 = vsel %vm798, %v797, %v789
        %s807 = scalar_lea.vmem %s1, 10
        %v808 = vld [vmem:[%s807] sm:$0x3]
        %v810 = vlaneseq
        %v811 = vshrl.u32 %v810, 7
        %v812 = vsub.s32 0, %v811
        %v813 = vrot.slane %v808, %v812
        %v814 = vlaneseq
        %v815 = vshrl.u32 %v814, 7
        %v816 = vsub.s32 1, %v815
        %v817 = vrot.slane %v808, %v816
        %v820 = vmul.f32 %v799, %v813
        %v821 = vmul.f32 %v803, %v817
        %v822 = vmul.f32 %v800, %v813
        %v823 = vmul.f32 %v804, %v817
        %v824 = vmul.f32 %v801, %v813
        %v825 = vmul.f32 %v805, %v817
        %v826 = vmul.f32 %v802, %v813
        %v827 = vmul.f32 %v806, %v817
        %828 = vset.pattern.permute.xlu0 12
        %829 = vperm.xlu0 %828, %v196
        %v830 = vpop.permute.xlu0 %829
        %832 = vset.pattern.permute.xlu0 12
        %833 = vperm.xlu0 %832, %v197
        %v834 = vpop.permute.xlu0 %833
        %836 = vset.pattern.permute.xlu0 12
        %837 = vperm.xlu0 %836, %v198
        %v838 = vpop.permute.xlu0 %837
        %840 = vset.pattern.permute.xlu0 12
        %841 = vperm.xlu0 %840, %v199
        %v842 = vpop.permute.xlu0 %841
        %v844 = vmul.f32 %v820, %v830
        %v845 = vmul.f32 %v821, %v830
        %v846 = vmul.f32 %v822, %v834
        %v847 = vmul.f32 %v823, %v834
        %v848 = vmul.f32 %v824, %v838
        %v849 = vmul.f32 %v825, %v838
        %v850 = vmul.f32 %v826, %v842
        %v851 = vmul.f32 %v827, %v842
        %v852 = vadd.f32 %v774, %v844
        %v853 = vadd.f32 %v775, %v845
        %v854 = vadd.f32 %v776, %v846
        %v855 = vadd.f32 %v777, %v847
        %v856 = vadd.f32 %v778, %v848
        %v857 = vadd.f32 %v779, %v849
        %v858 = vadd.f32 %v780, %v850
        %v859 = vadd.f32 %v781, %v851
        %860 = vrot.lane.b32.xlu0 %v359, 112
        %v861 = vpop.permute.xlu0 %860
        %862 = vrot.lane.b32.xlu0 %v361, 112
        %v863 = vpop.permute.xlu0 %862
        %864 = vrot.lane.b32.xlu0 %v363, 112
        %v865 = vpop.permute.xlu0 %864
        %866 = vrot.lane.b32.xlu0 %v365, 112
        %v867 = vpop.permute.xlu0 %866
        %868 = vrot.lane.b32.xlu0 %v360, 112
        %v869 = vpop.permute.xlu0 %868
        %870 = vrot.lane.b32.xlu0 %v362, 112
        %v871 = vpop.permute.xlu0 %870
        %872 = vrot.lane.b32.xlu0 %v364, 112
        %v873 = vpop.permute.xlu0 %872
        %874 = vrot.lane.b32.xlu0 %v366, 112
        %v875 = vpop.permute.xlu0 %874
        %vm876 = vcmp.lt.s32.totalorder %v408, 112
        %v877 = vsel %vm876, %v861, %v869
        %v878 = vsel %vm876, %v863, %v871
        %v879 = vsel %vm876, %v865, %v873
        %v880 = vsel %vm876, %v867, %v875
        %v881 = vsel %vm876, %v869, %v861
        %v882 = vsel %vm876, %v871, %v863
        %v883 = vsel %vm876, %v873, %v865
        %v884 = vsel %vm876, %v875, %v867
        %s885 = scalar_lea.vmem %s1, 12
        %v886 = vld [vmem:[%s885] sm:$0x3]
        %v888 = vlaneseq
        %v889 = vshrl.u32 %v888, 7
        %v890 = vsub.s32 0, %v889
        %v891 = vrot.slane %v886, %v890
        %v892 = vlaneseq
        %v893 = vshrl.u32 %v892, 7
        %v894 = vsub.s32 1, %v893
        %v895 = vrot.slane %v886, %v894
        %v898 = vmul.f32 %v877, %v891
        %v899 = vmul.f32 %v881, %v895
        %v900 = vmul.f32 %v878, %v891
        %v901 = vmul.f32 %v882, %v895
        %v902 = vmul.f32 %v879, %v891
        %v903 = vmul.f32 %v883, %v895
        %v904 = vmul.f32 %v880, %v891
        %v905 = vmul.f32 %v884, %v895
        %906 = vset.pattern.permute.xlu0 13
        %907 = vperm.xlu0 %906, %v196
        %v908 = vpop.permute.xlu0 %907
        %910 = vset.pattern.permute.xlu0 13
        %911 = vperm.xlu0 %910, %v197
        %v912 = vpop.permute.xlu0 %911
        %914 = vset.pattern.permute.xlu0 13
        %915 = vperm.xlu0 %914, %v198
        %v916 = vpop.permute.xlu0 %915
        %918 = vset.pattern.permute.xlu0 13
        %919 = vperm.xlu0 %918, %v199
        %v920 = vpop.permute.xlu0 %919
        %v922 = vmul.f32 %v898, %v908
        %v923 = vmul.f32 %v899, %v908
        %v924 = vmul.f32 %v900, %v912
        %v925 = vmul.f32 %v901, %v912
        %v926 = vmul.f32 %v902, %v916
        %v927 = vmul.f32 %v903, %v916
        %v928 = vmul.f32 %v904, %v920
        %v929 = vmul.f32 %v905, %v920
        %v930 = vadd.f32 %v852, %v922
        %v931 = vadd.f32 %v853, %v923
        %v932 = vadd.f32 %v854, %v924
        %v933 = vadd.f32 %v855, %v925
        %v934 = vadd.f32 %v856, %v926
        %v935 = vadd.f32 %v857, %v927
        %v936 = vadd.f32 %v858, %v928
        %v937 = vadd.f32 %v859, %v929
        %938 = vrot.lane.b32.xlu0 %v359, 111
        %v939 = vpop.permute.xlu0 %938
        %940 = vrot.lane.b32.xlu0 %v361, 111
        %v941 = vpop.permute.xlu0 %940
        %942 = vrot.lane.b32.xlu0 %v363, 111
        %v943 = vpop.permute.xlu0 %942
        %944 = vrot.lane.b32.xlu0 %v365, 111
        %v945 = vpop.permute.xlu0 %944
        %946 = vrot.lane.b32.xlu0 %v360, 111
        %v947 = vpop.permute.xlu0 %946
        %948 = vrot.lane.b32.xlu0 %v362, 111
        %v949 = vpop.permute.xlu0 %948
        %950 = vrot.lane.b32.xlu0 %v364, 111
        %v951 = vpop.permute.xlu0 %950
        %952 = vrot.lane.b32.xlu0 %v366, 111
        %v953 = vpop.permute.xlu0 %952
        %vm954 = vcmp.lt.s32.totalorder %v408, 111
        %v955 = vsel %vm954, %v939, %v947
        %v956 = vsel %vm954, %v941, %v949
        %v957 = vsel %vm954, %v943, %v951
        %v958 = vsel %vm954, %v945, %v953
        %v959 = vsel %vm954, %v947, %v939
        %v960 = vsel %vm954, %v949, %v941
        %v961 = vsel %vm954, %v951, %v943
        %v962 = vsel %vm954, %v953, %v945
        %s963 = scalar_lea.vmem %s1, 14
        %v964 = vld [vmem:[%s963] sm:$0x3]
        %v966 = vlaneseq
        %v967 = vshrl.u32 %v966, 7
        %v968 = vsub.s32 0, %v967
        %v969 = vrot.slane %v964, %v968
        %v970 = vlaneseq
        %v971 = vshrl.u32 %v970, 7
        %v972 = vsub.s32 1, %v971
        %v973 = vrot.slane %v964, %v972
        %v976 = vmul.f32 %v955, %v969
        %v977 = vmul.f32 %v959, %v973
        %v978 = vmul.f32 %v956, %v969
        %v979 = vmul.f32 %v960, %v973
        %v980 = vmul.f32 %v957, %v969
        %v981 = vmul.f32 %v961, %v973
        %v982 = vmul.f32 %v958, %v969
        %v983 = vmul.f32 %v962, %v973
        %984 = vset.pattern.permute.xlu0 14
        %985 = vperm.xlu0 %984, %v196
        %v986 = vpop.permute.xlu0 %985
        %988 = vset.pattern.permute.xlu0 14
        %989 = vperm.xlu0 %988, %v197
        %v990 = vpop.permute.xlu0 %989
        %992 = vset.pattern.permute.xlu0 14
        %993 = vperm.xlu0 %992, %v198
        %v994 = vpop.permute.xlu0 %993
        %996 = vset.pattern.permute.xlu0 14
        %997 = vperm.xlu0 %996, %v199
        %v998 = vpop.permute.xlu0 %997
        %v1000 = vmul.f32 %v976, %v986
        %v1001 = vmul.f32 %v977, %v986
        %v1002 = vmul.f32 %v978, %v990
        %v1003 = vmul.f32 %v979, %v990
        %v1004 = vmul.f32 %v980, %v994
        %v1005 = vmul.f32 %v981, %v994
        %v1006 = vmul.f32 %v982, %v998
        %v1007 = vmul.f32 %v983, %v998
        %v1008 = vadd.f32 %v930, %v1000
        %v1009 = vadd.f32 %v931, %v1001
        %v1010 = vadd.f32 %v932, %v1002
        %v1011 = vadd.f32 %v933, %v1003
        %v1012 = vadd.f32 %v934, %v1004
        %v1013 = vadd.f32 %v935, %v1005
        %v1014 = vadd.f32 %v936, %v1006
        %v1015 = vadd.f32 %v937, %v1007
        %1017 = vset.pattern.permute.xlu0 32
        %1018 = vperm.xlu0 %1017, %v200
        %v1019 = vpop.permute.xlu0 %1018
        %vm1021 = vcmask 261120
        %v1022 = vsel %vm1021, %v200, 0
        %1024 = vmatprep.subr.mxu0 %v1009
        %1025 = vmatpush1.msra.mxu0 %v1008
        %1026 = vmatprep.subr.mxu0 %v1011
        %1027 = vmatpush1.msra.mxu0 %v1010
        %1028 = vmatprep.subr.mxu0 %v1013
        %1029 = vmatpush1.msra.mxu0 %v1012
        %1030 = vmatprep.subr.mxu0 %v1015
        %1031 = vmatpush1.msra.mxu0 %v1014
        %1032 = vmatprep.subr.mxu0 0.0
        %1033 = vmatpush1.msra.mxu0 0.0
        %1034 = vmatprep.subr.mxu0 0.0
        %1035 = vmatpush1.msra.mxu0 0.0
        %1036 = vmatprep.subr.mxu0 0.0
        %1037 = vmatpush1.msra.mxu0 0.0
        %1038 = vmatprep.subr.mxu0 0.0
        %1039 = vmatpush1.msra.mxu0 0.0
        %1040 = vmatprep.subr.mxu0 0.0
        %1041 = vmatpush1.msra.mxu0 0.0
        %1042 = vmatprep.subr.mxu0 0.0
        %1043 = vmatpush1.msra.mxu0 0.0
        %1044 = vmatprep.subr.mxu0 0.0
        %1045 = vmatpush1.msra.mxu0 0.0
        %1046 = vmatprep.subr.mxu0 0.0
        %1047 = vmatpush1.msra.mxu0 0.0
        %1048 = vmatprep.subr.mxu0 0.0
        %1049 = vmatpush1.msra.mxu0 0.0
        %1050 = vmatprep.subr.mxu0 0.0
        %1051 = vmatpush1.msra.mxu0 0.0
        %1052 = vmatprep.subr.mxu0 0.0
        %1053 = vmatpush1.msra.mxu0 0.0
        %1054 = vmatprep.subr.mxu0 0.0
        %1055 = vmatpush1.msra.mxu0 0.0
        %1056 = vmatprep.subr.mxu0 0.0
        %1057 = vmatpush1.msra.mxu0 0.0
        %1058 = vmatprep.subr.mxu0 0.0
        %1059 = vmatpush1.msra.mxu0 0.0
        %1060 = vmatprep.subr.mxu0 0.0
        %1061 = vmatpush1.msra.mxu0 0.0
        %1062 = vmatprep.subr.mxu0 0.0
        %1063 = vmatpush1.msra.mxu0 0.0
        %1064 = vmatprep.subr.mxu0 0.0
        %1065 = vmatpush1.msra.mxu0 0.0
        %1066 = vmatprep.subr.mxu0 0.0
        %1067 = vmatpush1.msra.mxu0 0.0
        %1068 = vmatprep.subr.mxu0 0.0
        %1069 = vmatpush1.msra.mxu0 0.0
        %1070 = vmatprep.subr.mxu0 0.0
        %1071 = vmatpush1.msra.mxu0 0.0
        %1072 = vmatprep.subr.mxu0 0.0
        %1073 = vmatpush1.msra.mxu0 0.0
        %1074 = vmatprep.subr.mxu0 0.0
        %1075 = vmatpush1.msra.mxu0 0.0
        %1076 = vmatprep.subr.mxu0 0.0
        %1077 = vmatpush1.msra.mxu0 0.0
        %1078 = vmatprep.subr.mxu0 0.0
        %1079 = vmatpush1.msra.mxu0 0.0
        %1080 = vmatprep.subr.mxu0 0.0
        %1081 = vmatpush1.msra.mxu0 0.0
        %1082 = vmatprep.subr.mxu0 0.0
        %1083 = vmatpush1.msra.mxu0 0.0
        %1084 = vmatprep.subr.mxu0 0.0
        %1085 = vmatpush1.msra.mxu0 0.0
        %1086 = vmatprep.subr.mxu0 0.0
        %1087 = vmatpush1.msra.mxu0 0.0
        %1088 = vmatprep.mubr.f32.mxu0 0.0
        %1089 = vmatmul.mubr.f32.gmra.mrb[0].mxu0 %v1022
        %v1090 = vpop.f32.mrb[0].mxu0
        %v1091 = vadd.f32 %v1019, %v1090
        %v1092 = vpop.f32.mrb[0].mxu0
        %v1093 = vadd.f32 %v1019, %v1092
        %1094 = vdwg.mxu0
        %1095 = vst [vmem:[%s190] sm:$0xff] %v1091
        %1096 = vst [vmem:[%s190 + $0x8] sm:$0xff] %v1093
        %s1097 = sand.u32 %s115, 1
        %s1098 = scalar_lea.sflag [#allocation3], %s1097
        %s1099 = sand.u32 %s115, 1
        %s1100 = smul.addr %s1099, 16
        %s1101 = scalar_lea.vmem [#allocation2], %s1100
        // Predicated region
        $region37: #{tpu_custom_call.1} parent=35 // pred_check
          %p1102 = pneg %p125
        $region38: #{tpu_custom_call.1} parent=35 // pred_check_branch
          %1104 = sbr.rel (%p1102) target = $region40
        $region39: #{tpu_custom_call.1} parent=35 // pred_region
          %s1106 = ssub.s32 256, 256
          %1107 = vsyncadd %s1098, %s1106
          %s1108 = smul.addr %s18, 2
          %s1109 = smul.addr %s1108, 128
          %s1110 = scalar_lea.hbm %s4, %s1109
          %s1112 = sshll.u32 %s1101, 4
          %s1113 = int_to_ptr.vmem [resolvable:$true] %s1112
          %1115 = dma.vmem_to_hbm [thread:$0]  %s1113, 256, %s1110, %s1098
        $region40: #{tpu_custom_call.1} parent=35 // pred_fallthru
          _
      $region36: #{tpu_custom_call.1} parent=5 // pred_fallthru
        _
      %p1116 = scmp.le.s32.totalorder 2, %s13
      // Predicated region
      $region41: #{tpu_custom_call.1} parent=5 // pred_check
        %p1117 = pneg %p1116
      $region42: #{tpu_custom_call.1} parent=5 // pred_check_branch
        %1119 = sbr.rel (%p1117) target = $region44
      $region43: #{tpu_custom_call.1} parent=5 // pred_region
        %s1120 = ssub.s32 %s13, 2
        // Predicated region
        $region45: #{tpu_custom_call.1} parent=43 // pred_check
          %p1121 = pneg %p131
        $region46: #{tpu_custom_call.1} parent=43 // pred_check_branch
          %1123 = sbr.rel (%p1121) target = $region48
        $region47: #{tpu_custom_call.1} parent=43 // pred_region
          %s1124 = sand.u32 %s116, 1
          %s1125 = scalar_lea.sflag [#allocation3], %s1124
          %s1126 = sand.u32 %s116, 1
          %s1127 = smul.addr %s1126, 16
          %s1128 = scalar_lea.vmem [#allocation2], %s1127
          %1129 = dma.done %s1125, 256
        $region48: #{tpu_custom_call.1} parent=43 // pred_fallthru
          _
      $region44: #{tpu_custom_call.1} parent=5 // pred_fallthru
        _
    $region6: #{tpu_custom_call.1} parent=1 // loop_footer
      %s17 = sadd.s32 1, %s13
    $region7: #{tpu_custom_call.1} parent=1 // loop_footer_branch
      %12 = sbr.rel target = $region3
    $region8: #{tpu_custom_call.1} parent=1 // loop_exit
      _
    %1130 = vsyncpa [#allocation3], 1
    %s1131 = scalar_lea.sflag [#allocation3], 1
    %1132 = vsyncpa %s1131, 1

</llo_original>
